<compile_context>
chip_gen: v7x
topology: tpu7x:2x2x1
jax: 0.10.0
libtpu: 0.0.40
codegen_flags: <defaults>
</compile_context>

<pallas_src>
import jax
import jax.numpy as jnp
from jax.experimental import pallas as pl
from jax.experimental.pallas import tpu as pltpu

# Detectron2 default BGR pixel statistics (cfg.MODEL.PIXEL_MEAN / PIXEL_STD),
# initialized deterministically in-script instead of from a config file.
PIXEL_MEAN = (103.530, 116.280, 123.675)
PIXEL_STD = (1.0, 1.0, 1.0)

_TARGET_BLOCK_BYTES = 4 << 20          # ~4 MiB streaming tiles
_VMEM_LIMIT_BYTES = 48 << 20           # headroom under v7x's 64 MiB physical VMEM


def _choose_row_tile(total_rows, row_bytes, target_bytes=_TARGET_BLOCK_BYTES):
    """Row tile: single block when small, else a multiple of 8 with block <= ~target.

    The grid uses pl.cdiv, so total_rows need NOT be divisible by the tile —
    the last (overhang) block is masked by Pallas.
    """
    if total_rows * row_bytes <= target_bytes:
        return total_rows                               # one block; full extent is always legal
    tr = max(8, (target_bytes // max(row_bytes, 1)) // 8 * 8)
    return min(tr, max(8, total_rows // 8 * 8))


# --------------------------------------------------------------------------
# Kernel 1: image preprocessing
#   out = (floor(x*255) - mean) / std   ==   floor(x*255) * inv_std - mean*inv_std
# Image viewed as (B*H, W*C): lane dim is W*C (lane-dense).  scale/bias are the
# C-periodic inv_std / -mean*inv_std rows, resident in VMEM (constant index_map).
# --------------------------------------------------------------------------
def _preprocess_kernel(img_ref, scale_ref, bias_ref, out_ref):
    # img_ref: (TR, W*C) float32 in [0, 1].  floor == uint8 truncation for [0,1];
    # clip guards mildly out-of-range inputs (uint8 wrap is not reproduced).
    q = jnp.floor(jnp.clip(img_ref[...], 0.0, 1.0) * 255.0)
    out_ref[...] = q * scale_ref[...] + bias_ref[...]   # single FMA, no divide


def preprocess_images(imgs_nhwc, mean, inv_std, *, row_tile=None,
                      vmem_limit_bytes=_VMEM_LIMIT_BYTES):
    """imgs_nhwc: (B, H, W, C) float32 in [0,1]; mean/inv_std: (C,) float32."""
    B, H, W, C = imgs_nhwc.shape
    WC = W * C
    R = B * H
    x = imgs_nhwc.reshape(R, WC)                          # free (contiguous) reshape
    scale = jnp.tile(inv_std, W).reshape(1, WC)           # C-periodic inv_std row
    bias = jnp.tile(-mean * inv_std, W).reshape(1, WC)    # C-periodic -mean*inv_std row

    TR = row_tile if row_tile is not None else _choose_row_tile(R, WC * 4)
    grid = (pl.cdiv(R, TR),)

    out = pl.pallas_call(
        _preprocess_kernel,
        out_shape=jax.ShapeDtypeStruct((R, WC), jnp.float32),
        grid=grid,
        in_specs=[
            pl.BlockSpec((TR, WC), lambda r: (r, 0)),
            pl.BlockSpec((1, WC), lambda r: (0, 0)),      # constant block -> DMA'd once
            pl.BlockSpec((1, WC), lambda r: (0, 0)),
        ],
        out_specs=pl.BlockSpec((TR, WC), lambda r: (r, 0)),
        compiler_params=pltpu.CompilerParams(
            dimension_semantics=("parallel",),
            vmem_limit_bytes=vmem_limit_bytes),
    )(x, scale, bias)
    return out.reshape(B, H, W, C)                        # NHWC kept end-to-end


# --------------------------------------------------------------------------
# Kernel 2: per-instance mask normalization
#   raw_masks_norm[j] = raw_masks[j] / max(raw_masks[j])   (ones if max == 0)
# Tiled over N (per-row max reduction stays inside one block); rows are the
# lane-dense flattening K*Hm*Wm; multiply by the per-row reciprocal of the max.
# --------------------------------------------------------------------------
def _mask_norm_kernel(masks_ref, out_ref):
    m = masks_ref[...]                                 # (TN, F)
    mx = jnp.max(m, axis=-1, keepdims=True)            # (TN, 1) per-instance max
    is_zero = mx == 0.0
    inv = 1.0 / jnp.where(is_zero, 1.0, mx)            # TN exact reciprocals
    out_ref[...] = jnp.where(is_zero, jnp.ones_like(m), m * inv)


def normalize_masks(raw_masks, *, row_tile=None,
                    vmem_limit_bytes=_VMEM_LIMIT_BYTES):
    """raw_masks: (N, K, Hm, Wm) float32 — Detectron2 pred_masks style."""
    N, K, Hm, Wm = raw_masks.shape
    F = K * Hm * Wm
    flat = raw_masks.reshape(N, F).astype(jnp.float32)

    if row_tile is not None:
        TN = row_tile
    elif N * F * 4 <= _TARGET_BLOCK_BYTES:
        TN = N                                          # one block; full extent is legal
    else:
        TN = max(8, (_TARGET_BLOCK_BYTES // (F * 4)) // 8 * 8)
        TN = min(TN, N)                                 # (N<8 huge-F edge case -> full extent)
    grid = (pl.cdiv(N, TN),)

    out = pl.pallas_call(
        _mask_norm_kernel,
        out_shape=jax.ShapeDtypeStruct((N, F), jnp.float32),
        grid=grid,
        in_specs=[pl.BlockSpec((TN, F), lambda i: (i, 0))],
        out_specs=pl.BlockSpec((TN, F), lambda i: (i, 0)),
        compiler_params=pltpu.CompilerParams(
            dimension_semantics=("parallel",),
            vmem_limit_bytes=vmem_limit_bytes),
    )(flat)
    return out.reshape(N, K, Hm, Wm)


# --------------------------------------------------------------------------
# boxes.scale(scale_x=1/width, scale_y=1/height)
# Plain JAX: ~N*4 multiplies — a pallas_call here is pure launch/DMA overhead;
# XLA fuses this for free.
# --------------------------------------------------------------------------
def scale_boxes(boxes, *, width, height):
    scale = jnp.array([1.0 / width, 1.0 / height, 1.0 / width, 1.0 / height],
                      dtype=jnp.float32)
    return boxes.astype(jnp.float32) * scale


# --------------------------------------------------------------------------
# Forward-style wrapper (synthetic stand-ins for the Detectron2 model pieces)
# --------------------------------------------------------------------------
def instance_segmentation_forward(imgs_hwc, raw_masks, boxes_img, width, height):
    mean = jnp.array(PIXEL_MEAN, jnp.float32)
    inv_std = 1.0 / jnp.array(PIXEL_STD, jnp.float32)

    # preprocess_imgs(): *255 -> uint8 trunc -> (x - mean)/std   (kept NHWC)
    images = preprocess_images(imgs_hwc, mean, inv_std)

    # TODO(synk): backbone(images) / proposal_generator / roi_heads go here.
    masks_norm = normalize_masks(raw_masks)
    boxes_norm = scale_boxes(boxes_img, width=width, height=height)
    return images, masks_norm, boxes_norm


if __name__ == "__main__":
    key = jax.random.PRNGKey(0)
    k1, k2, k3 = jax.random.split(key, 3)

    # input_imgs: (B, H, W, C) float32 in [0, 1]  (same convention as the torch
    # code, which reads height/width from imgs[0].shape[:2])
    B, H, W, C = 2, 16, 16, 3
    imgs_hwc = jax.random.uniform(k1, (B, H, W, C), dtype=jnp.float32)

    # synthetic ROI-head outputs (pred_masks are (N, 1, 28, 28) in Detectron2)
    N, Hm, Wm = 5, 28, 28
    raw_masks = jax.random.uniform(k2, (N, 1, Hm, Wm), dtype=jnp.float32)
    raw_masks = raw_masks.at[2].set(0.0)   # exercise the max == 0 -> all-ones branch
    boxes_img = jax.random.uniform(k3, (N, 4), dtype=jnp.float32) * jnp.array(
        [W, H, W, H], jnp.float32)

    images, masks_norm, boxes_norm = instance_segmentation_forward(
        imgs_hwc, raw_masks, boxes_img, width=W, height=H)
    jax.block_until_ready((images, masks_norm, boxes_norm))

    # plain-JAX references for a light correctness check (NHWC layout)
    mean = jnp.array(PIXEL_MEAN, jnp.float32).reshape(1, 1, 1, C)
    std = jnp.array(PIXEL_STD, jnp.float32).reshape(1, 1, 1, C)
    ref_img = (jnp.floor(imgs_hwc * 255.0) - mean) / std
    mx = jnp.max(raw_masks, axis=(1, 2, 3), keepdims=True)
    ref_masks = jnp.where(mx == 0.0, jnp.ones_like(raw_masks),
                          raw_masks / jnp.where(mx == 0.0, 1.0, mx))
    ref_boxes = boxes_img * jnp.array([[1.0 / W, 1.0 / H, 1.0 / W, 1.0 / H]],
                                      jnp.float32)

    assert jnp.allclose(images, ref_img, atol=1e-4), "preprocess mismatch"
    assert jnp.allclose(masks_norm, ref_masks, atol=1e-5), "mask-norm mismatch"
    assert jnp.allclose(boxes_norm, ref_boxes, atol=1e-6), "box-scale mismatch"
    print("KERNEL_OK")
</pallas_src>

<mosaic_0001>
module attributes {stable_mosaic.version = 11 : i64} {
  func.func @_preprocess_kernel(%arg0: i32, %arg1: memref<32x48xf32, #tpu.memory_space<vmem>>, %arg2: memref<1x48xf32, #tpu.memory_space<vmem>>, %arg3: memref<1x48xf32, #tpu.memory_space<vmem>>, %arg4: memref<32x48xf32, #tpu.memory_space<vmem>>) attributes {dimension_semantics = [#tpu.dimension_semantics<parallel>], iteration_bounds = array<i64: 1>, scalar_prefetch = 0 : i64, scratch_operands = 0 : i64, tpu.core_type = #tpu.core_type<tc>, window_params = [{transform_indices = @transform_0, window_bounds = array<i64: 32, 48>}, {pipeline_mode = #tpu.pipeline_mode<synchronous>, transform_indices = @transform_1, window_bounds = array<i64: 1, 48>}, {pipeline_mode = #tpu.pipeline_mode<synchronous>, transform_indices = @transform_2, window_bounds = array<i64: 1, 48>}, {transform_indices = @transform_3, window_bounds = array<i64: 32, 48>}]} {
    %c0 = arith.constant 0 : index
    %c0_0 = arith.constant 0 : index
    %0 = vector.load %arg1[%c0, %c0_0] : memref<32x48xf32, #tpu.memory_space<vmem>>, vector<32x48xf32>
    %cst = arith.constant 0.000000e+00 : f32
    %cst_1 = arith.constant 1.000000e+00 : f32
    %1 = vector.broadcast %cst : f32 to vector<32x48xf32>
    %2 = arith.maximumf %1, %0 : vector<32x48xf32>
    %3 = vector.broadcast %cst_1 : f32 to vector<32x48xf32>
    %4 = arith.minimumf %3, %2 : vector<32x48xf32>
    %cst_2 = arith.constant 2.550000e+02 : f32
    %5 = vector.broadcast %cst_2 : f32 to vector<32x48xf32>
    %6 = arith.mulf %4, %5 : vector<32x48xf32>
    %7 = math.floor %6 : vector<32x48xf32>
    %c0_3 = arith.constant 0 : index
    %c0_4 = arith.constant 0 : index
    %8 = vector.load %arg2[%c0_3, %c0_4] : memref<1x48xf32, #tpu.memory_space<vmem>>, vector<1x48xf32>
    %9 = vector.broadcast %8 : vector<1x48xf32> to vector<32x48xf32>
    %10 = arith.mulf %7, %9 : vector<32x48xf32>
    %c0_5 = arith.constant 0 : index
    %c0_6 = arith.constant 0 : index
    %11 = vector.load %arg3[%c0_5, %c0_6] : memref<1x48xf32, #tpu.memory_space<vmem>>, vector<1x48xf32>
    %12 = vector.broadcast %11 : vector<1x48xf32> to vector<32x48xf32>
    %13 = arith.addf %10, %12 : vector<32x48xf32>
    %c0_7 = arith.constant 0 : index
    %c0_8 = arith.constant 0 : index
    %14 = vector.load %arg4[%c0_7, %c0_8] : memref<32x48xf32, #tpu.memory_space<vmem>>, vector<32x48xf32>
    tpu.vector_store %arg4[%c0_7, %c0_8], %13 {strides = array<i32>} : memref<32x48xf32, #tpu.memory_space<vmem>>, vector<32x48xf32>,
    return
  }
  func.func @transform_0(%arg0: i32) -> (i32, i32) {
    %c0_i32 = arith.constant 0 : i32
    %c0_i32_0 = arith.constant 0 : i32
    return %arg0, %c0_i32 : i32, i32
  }
  func.func @transform_1(%arg0: i32) -> (i32, i32) {
    %c0_i32 = arith.constant 0 : i32
    %c0_i32_0 = arith.constant 0 : i32
    %c0_i32_1 = arith.constant 0 : i32
    return %c0_i32, %c0_i32_0 : i32, i32
  }
  func.func @transform_2(%arg0: i32) -> (i32, i32) {
    %c0_i32 = arith.constant 0 : i32
    %c0_i32_0 = arith.constant 0 : i32
    %c0_i32_1 = arith.constant 0 : i32
    return %c0_i32, %c0_i32_0 : i32, i32
  }
  func.func @transform_3(%arg0: i32) -> (i32, i32) {
    %c0_i32 = arith.constant 0 : i32
    %c0_i32_0 = arith.constant 0 : i32
    return %arg0, %c0_i32 : i32, i32
  }
}

</mosaic_0001>

<llo_original>
// kernel: tpu_custom_call.1
$region0: #{tpu_custom_call.1}
  #allocation0 [shape = 'u32[]', space=smem, size = 0x4, offset = 0x4, fixed_abs, tag = 'smem constant byte address 0x4 - core index']
  #allocation1 [shape = 'u32[144,128]{1,0:T(1,128)}', space=vmem, size = 0x12000, scoped, tag = 'internal scratch']
  %s0 = inlined_call_operand.hbm [shape: f32[32,48], index: 0, kind: input, shape index: {}]
  %s1 = inlined_call_operand.vmem [shape: f32[1,48], index: 1, kind: input, shape index: {}]
  %s2 = inlined_call_operand.vmem [shape: f32[1,48], index: 2, kind: input, shape index: {}]
  %s3 = inlined_call_operand.hbm [shape: f32[32,48], index: 3, kind: output, shape index: {}]
  %s4 = sld [smem:[#allocation0]]
  $region26: #{tpu_custom_call.1} parent=0
    _
  %s6 = ssub.s32 1, %s4
  %s7 = scalar_select 0, %s6, %s4
  $region1: #{tpu_custom_call.1} parent=0
    #allocation2 [shape = 'u8[16384]{0}', space=vmem, size = 0x4000, scoped, tag = 'input window, operand 0, single buffered']
    #allocation3 [shape = 's32[1]{0}', space=sflag, size = 0x4, scoped, tag = 'scoped memory for tpu_custom_call.1']
    #allocation4 [shape = 's32[1]{0}', space=sflag, size = 0x4, scoped, tag = 'scoped memory for tpu_custom_call.1']
    #allocation5 [shape = 'u8[16384]{0}', space=vmem, size = 0x4000, scoped, tag = 'output window, operand 0, single buffered']
    %8 = vsyncpa [#allocation3], 0
    %9 = vsyncpa [#allocation4], 0
    // Predicated region
    $region2: #{tpu_custom_call.1} parent=1 // pred_check
      _
    $region3: #{tpu_custom_call.1} parent=1 // pred_check_branch
      %11 = sbr.rel (0) target = $region5
    $region4: #{tpu_custom_call.1} parent=1 // pred_region
      %s13 = ssub.s32 512, 512
      %14 = vsyncadd [#allocation3], %s13
      %s15 = sshll.u32 [#allocation2], 4
      %s16 = int_to_ptr.vmem [resolvable:$true] %s15
      %21 = dma.hbm_to_vmem [thread:$0]  %s0, 512, %s16, [#allocation3], 128, 128, 8
    $region5: #{tpu_custom_call.1} parent=1 // pred_fallthru
      _
    // Predicated region
    $region6: #{tpu_custom_call.1} parent=1 // pred_check
      _
    $region7: #{tpu_custom_call.1} parent=1 // pred_check_branch
      %23 = sbr.rel (0) target = $region9
    $region8: #{tpu_custom_call.1} parent=1 // pred_region
      _
    $region9: #{tpu_custom_call.1} parent=1 // pred_fallthru
      _
    // Predicated region
    $region10: #{tpu_custom_call.1} parent=1 // pred_check
      _
    $region11: #{tpu_custom_call.1} parent=1 // pred_check_branch
      %25 = sbr.rel (0) target = $region13
    $region12: #{tpu_custom_call.1} parent=1 // pred_region
      _
    $region13: #{tpu_custom_call.1} parent=1 // pred_fallthru
      _
    // Predicated region
    $region14: #{tpu_custom_call.1} parent=1 // pred_check
      _
    $region15: #{tpu_custom_call.1} parent=1 // pred_check_branch
      %27 = sbr.rel (0) target = $region17
    $region16: #{tpu_custom_call.1} parent=1 // pred_region
      %28 = dma.done [#allocation3], 512
    $region17: #{tpu_custom_call.1} parent=1 // pred_fallthru
      _
    %v29 = vld [vmem:[#allocation2] sm:$0xff]
    %v30 = vld [vmem:[#allocation2 + $0x8] sm:$0xff]
    %v31 = vld [vmem:[#allocation2 + $0x10] sm:$0xff]
    %v32 = vld [vmem:[#allocation2 + $0x18] sm:$0xff]
    %v33 = vmax.f32 %v29, 0.0
    %v34 = vmax.f32 %v30, 0.0
    %v35 = vmax.f32 %v31, 0.0
    %v36 = vmax.f32 %v32, 0.0
    %v37 = vmin.f32 %v33, 1.0
    %v38 = vmin.f32 %v34, 1.0
    %v39 = vmin.f32 %v35, 1.0
    %v40 = vmin.f32 %v36, 1.0
    %v41 = vmul.f32 %v37, 255.0
    %v42 = vmul.f32 %v38, 255.0
    %v43 = vmul.f32 %v39, 255.0
    %v44 = vmul.f32 %v40, 255.0
    %v45 = vfloor.f32 %v41
    %v46 = vfloor.f32 %v42
    %v47 = vfloor.f32 %v43
    %v48 = vfloor.f32 %v44
    %v49 = vld [vmem:[%s1] sm:$0x1]
    %v51 = vlaneseq
    %v52 = vshrl.u32 %v51, 7
    %v53 = vsub.s32 0, %v52
    %v54 = vrot.slane %v49, %v53
    %v56 = vmul.f32 %v45, %v54
    %v57 = vmul.f32 %v46, %v54
    %v58 = vmul.f32 %v47, %v54
    %v59 = vmul.f32 %v48, %v54
    %v60 = vld [vmem:[%s2] sm:$0x1]
    %v62 = vlaneseq
    %v63 = vshrl.u32 %v62, 7
    %v64 = vsub.s32 0, %v63
    %v65 = vrot.slane %v60, %v64
    %v67 = vadd.f32 %v56, %v65
    %v68 = vadd.f32 %v57, %v65
    %v69 = vadd.f32 %v58, %v65
    %v70 = vadd.f32 %v59, %v65
    %vm71 = vcmask 392192
    %72 = vst.msk [vmem:[#allocation5] sm:$0xff] %vm71, %v67
    %73 = vst.msk [vmem:[#allocation5 + $0x8] sm:$0xff] %vm71, %v68
    %74 = vst.msk [vmem:[#allocation5 + $0x10] sm:$0xff] %vm71, %v69
    %75 = vst.msk [vmem:[#allocation5 + $0x18] sm:$0xff] %vm71, %v70
    // Predicated region
    $region18: #{tpu_custom_call.1} parent=1 // pred_check
      _
    $region19: #{tpu_custom_call.1} parent=1 // pred_check_branch
      %77 = sbr.rel (0) target = $region21
    $region20: #{tpu_custom_call.1} parent=1 // pred_region
      %s79 = ssub.s32 512, 512
      %80 = vsyncadd [#allocation4], %s79
      %s81 = sshll.u32 [#allocation5], 4
      %s82 = int_to_ptr.vmem [resolvable:$true] %s81
      %87 = dma.vmem_to_hbm [thread:$0]  %s82, 512, %s3, [#allocation4], 128, 128, 8
    $region21: #{tpu_custom_call.1} parent=1 // pred_fallthru
      _
    // Predicated region
    $region22: #{tpu_custom_call.1} parent=1 // pred_check
      _
    $region23: #{tpu_custom_call.1} parent=1 // pred_check_branch
      %89 = sbr.rel (0) target = $region25
    $region24: #{tpu_custom_call.1} parent=1 // pred_region
      %90 = dma.done [#allocation4], 512
    $region25: #{tpu_custom_call.1} parent=1 // pred_fallthru
      _
    %91 = vsyncpa [#allocation3], 1
    %92 = vsyncpa [#allocation4], 1

</llo_original>
